<compile_context>
chip_gen: v7x
topology: tpu7x:2x2x1
jax: 0.10.0
libtpu: 0.0.40
codegen_flags: <defaults>
</compile_context>

<pallas_src>
import functools

import jax
import jax.numpy as jnp
from jax.experimental import pallas as pl
from jax.experimental.pallas import tpu as pltpu

HIDDEN = 64 * 3      # 192, as in the PyTorch module
HIDDEN_PAD = 256     # lane-aligned hidden width (multiple of 128)
W3_COLS = 128        # fc3 runs 128 lanes wide in-register; extra cols never stored


def _round_up(n: int, m: int) -> int:
    return ((n + m - 1) // m) * m


def mlp_kernel(x_ref, w1_ref, b1_ref, w2_ref, b2_ref, w3_ref, b3_ref, o_ref):
    """Fused MLP on one (TB, S) tile of rows. Weights are VMEM-resident bf16."""
    x = x_ref[...]  # (tb, S) bf16

    # fc1 + ReLU (accumulate f32, bias/ReLU f32, re-cast bf16 for next MXU pass)
    h1 = jnp.dot(x, w1_ref[...], preferred_element_type=jnp.float32)
    h1 = jnp.maximum(h1 + b1_ref[...], 0.0).astype(jnp.bfloat16)

    # fc2 + ReLU
    h2 = jnp.dot(h1, w2_ref[...], preferred_element_type=jnp.float32)
    h2 = jnp.maximum(h2 + b2_ref[...], 0.0).astype(jnp.bfloat16)

    # fc3 (no activation): 128-lane matmul in-register, store only real columns.
    out = jnp.dot(h2, w3_ref[...], preferred_element_type=jnp.float32) + b3_ref[...]
    o_ref[...] = out[:, : o_ref.shape[1]].astype(o_ref.dtype)


def neural_network_forward(x, padded_params, *, action_size, block_rows=512):
    """Batched forward: tiles the batch, keeps weights resident across tiles."""
    w1, b1, w2, b2, w3, b3 = padded_params
    B, S = x.shape
    x = x.astype(jnp.bfloat16)  # halves x-tile DMA; accumulation stays f32

    # Batch tile: multiple of 8 sublanes; Pallas masks the partial last block.
    tb = min(block_rows, _round_up(B, 8))
    num_tiles = pl.cdiv(B, tb)

    row_in_spec = pl.BlockSpec((tb, S), lambda i: (i, 0))          # tiled over batch
    row_out_spec = pl.BlockSpec((tb, action_size), lambda i: (i, 0))
    const_spec = lambda shape: pl.BlockSpec(shape, lambda i: (0, 0))  # VMEM-resident

    flops = 2 * B * (S * HIDDEN_PAD + HIDDEN_PAD * HIDDEN_PAD + HIDDEN_PAD * W3_COLS)
    bytes_accessed = (
        B * S * 2                                                   # x (bf16)
        + (S * HIDDEN_PAD + HIDDEN_PAD * HIDDEN_PAD + HIDDEN_PAD * W3_COLS) * 2  # weights
        + (HIDDEN_PAD + HIDDEN_PAD + W3_COLS) * 4                   # biases (f32)
        + B * action_size * 4                                       # output (f32)
    )

    out = pl.pallas_call(
        mlp_kernel,
        out_shape=jax.ShapeDtypeStruct((B, action_size), jnp.float32),
        grid=(num_tiles,),
        in_specs=[
            row_in_spec,
            const_spec(w1.shape), const_spec(b1.shape),
            const_spec(w2.shape), const_spec(b2.shape),
            const_spec(w3.shape), const_spec(b3.shape),
        ],
        out_specs=row_out_spec,
        compiler_params=pltpu.CompilerParams(
            dimension_semantics=("parallel",),  # v7x: batch tiles split across both TCs
        ),
        cost_estimate=pl.CostEstimate(
            flops=flops, transcendentals=0, bytes_accessed=bytes_accessed),
    )(x, w1, b1, w2, b2, w3, b3)
    return out


def init_params(key, state_size, action_size):
    """Deterministic init mimicking PyTorch nn.Linear default (uniform +/- 1/sqrt(fan_in))."""
    ks = jax.random.split(key, 6)

    def linear(kw, kb, fan_in, fan_out):
        bound = 1.0 / jnp.sqrt(fan_in)
        w = jax.random.uniform(kw, (fan_in, fan_out), jnp.float32, -bound, bound)
        b = jax.random.uniform(kb, (1, fan_out), jnp.float32, -bound, bound)
        return w, b

    w1, b1 = linear(ks[0], ks[1], state_size, HIDDEN)
    w2, b2 = linear(ks[2], ks[3], HIDDEN, HIDDEN)
    w3, b3 = linear(ks[4], ks[5], HIDDEN, action_size)
    return w1, b1, w2, b2, w3, b3


def pad_params(params, action_size):
    """Zero-pad HIDDEN->HIDDEN_PAD (and fc3 cols->W3_COLS); weights bf16, biases f32.

    Padded hidden units have zero weight and zero bias, so they are exactly 0 after
    ReLU and contribute nothing downstream; padded fc3 columns are never stored.
    """
    w1, b1, w2, b2, w3, b3 = params
    hp = HIDDEN_PAD - HIDDEN
    op = W3_COLS - action_size
    bf = jnp.bfloat16
    return (
        jnp.pad(w1, ((0, 0), (0, hp))).astype(bf), jnp.pad(b1, ((0, 0), (0, hp))),
        jnp.pad(w2, ((0, hp), (0, hp))).astype(bf), jnp.pad(b2, ((0, 0), (0, hp))),
        jnp.pad(w3, ((0, hp), (0, op))).astype(bf), jnp.pad(b3, ((0, 0), (0, op))),
    )


if __name__ == "__main__":
    key = jax.random.PRNGKey(0)
    k_params, k_x = jax.random.split(key)

    # Small shapes consistent with the module; batch deliberately NOT a multiple of
    # the tile so the Pallas partial-block path (no wrapper pad/slice) is exercised,
    # and >= 2 tiles so the parallel batch axis is exercised.
    batch = 200
    state_size = 16
    action_size = 4

    params = init_params(k_params, state_size, action_size)
    padded = pad_params(params, action_size)
    x = jax.random.normal(k_x, (batch, state_size), jnp.float32)

    fwd = jax.jit(functools.partial(
        neural_network_forward, action_size=action_size, block_rows=128))
    out = fwd(x, padded)
    jax.block_until_ready(out)

    # Reference in plain JAX (f32, unpadded parameters).
    w1, b1, w2, b2, w3, b3 = params
    ref = jnp.maximum(x @ w1 + b1, 0.0)
    ref = jnp.maximum(ref @ w2 + b2, 0.0)
    ref = ref @ w3 + b3

    assert out.shape == (batch, action_size)
    # bf16 weights/inputs/intermediates (f32 accumulation) -> ~1% tolerance.
    assert jnp.allclose(out, ref, atol=5e-2, rtol=5e-2)

    print("KERNEL_OK")
</pallas_src>

<mosaic_0001>
module attributes {stable_mosaic.version = 11 : i64} {
  func.func @mlp_kernel(%arg0: i32, %arg1: memref<128x16xbf16, #tpu.memory_space<vmem>>, %arg2: memref<16x256xbf16, #tpu.memory_space<vmem>>, %arg3: memref<1x256xf32, #tpu.memory_space<vmem>>, %arg4: memref<256x256xbf16, #tpu.memory_space<vmem>>, %arg5: memref<1x256xf32, #tpu.memory_space<vmem>>, %arg6: memref<256x128xbf16, #tpu.memory_space<vmem>>, %arg7: memref<1x128xf32, #tpu.memory_space<vmem>>, %arg8: memref<128x4xf32, #tpu.memory_space<vmem>>) attributes {dimension_semantics = [#tpu.dimension_semantics<parallel>], iteration_bounds = array<i64: 2>, scalar_prefetch = 0 : i64, scratch_operands = 0 : i64, tpu.core_type = #tpu.core_type<tc>, window_params = [{transform_indices = @transform_0, window_bounds = array<i64: 128, 16>}, {pipeline_mode = #tpu.pipeline_mode<synchronous>, transform_indices = @transform_1, window_bounds = array<i64: 16, 256>}, {pipeline_mode = #tpu.pipeline_mode<synchronous>, transform_indices = @transform_2, window_bounds = array<i64: 1, 256>}, {pipeline_mode = #tpu.pipeline_mode<synchronous>, transform_indices = @transform_3, window_bounds = array<i64: 256, 256>}, {pipeline_mode = #tpu.pipeline_mode<synchronous>, transform_indices = @transform_4, window_bounds = array<i64: 1, 256>}, {pipeline_mode = #tpu.pipeline_mode<synchronous>, transform_indices = @transform_5, window_bounds = array<i64: 256, 128>}, {pipeline_mode = #tpu.pipeline_mode<synchronous>, transform_indices = @transform_6, window_bounds = array<i64: 1, 128>}, {transform_indices = @transform_7, window_bounds = array<i64: 128, 4>}]} {
    %c0 = arith.constant 0 : index
    %c0_0 = arith.constant 0 : index
    %0 = vector.load %arg1[%c0, %c0_0] : memref<128x16xbf16, #tpu.memory_space<vmem>>, vector<128x16xbf16>
    %c0_1 = arith.constant 0 : index
    %c0_2 = arith.constant 0 : index
    %1 = vector.load %arg2[%c0_1, %c0_2] : memref<16x256xbf16, #tpu.memory_space<vmem>>, vector<16x256xbf16>
    %cst = arith.constant dense<0.000000e+00> : vector<128x256xf32>
    %2 = tpu.matmul %0, %1, %cst {dimension_numbers = #tpu.dot_dimension_numbers<[1], [0], [0], [1], [0, 0, 1, 1], [], []>} : vector<128x16xbf16>, vector<16x256xbf16>, vector<128x256xf32> -> vector<128x256xf32>
    %c0_3 = arith.constant 0 : index
    %c0_4 = arith.constant 0 : index
    %3 = vector.load %arg3[%c0_3, %c0_4] : memref<1x256xf32, #tpu.memory_space<vmem>>, vector<1x256xf32>
    %4 = vector.broadcast %3 : vector<1x256xf32> to vector<128x256xf32>
    %5 = arith.addf %2, %4 : vector<128x256xf32>
    %cst_5 = arith.constant 0.000000e+00 : f32
    %6 = vector.broadcast %cst_5 : f32 to vector<128x256xf32>
    %7 = arith.maximumf %5, %6 : vector<128x256xf32>
    %8 = arith.truncf %7 : vector<128x256xf32> to vector<128x256xbf16>
    %c0_6 = arith.constant 0 : index
    %c0_7 = arith.constant 0 : index
    %9 = vector.load %arg4[%c0_6, %c0_7] : memref<256x256xbf16, #tpu.memory_space<vmem>>, vector<256x256xbf16>
    %cst_8 = arith.constant dense<0.000000e+00> : vector<128x256xf32>
    %10 = tpu.matmul %8, %9, %cst_8 {dimension_numbers = #tpu.dot_dimension_numbers<[1], [0], [0], [1], [0, 0, 1, 1], [], []>} : vector<128x256xbf16>, vector<256x256xbf16>, vector<128x256xf32> -> vector<128x256xf32>
    %c0_9 = arith.constant 0 : index
    %c0_10 = arith.constant 0 : index
    %11 = vector.load %arg5[%c0_9, %c0_10] : memref<1x256xf32, #tpu.memory_space<vmem>>, vector<1x256xf32>
    %12 = vector.broadcast %11 : vector<1x256xf32> to vector<128x256xf32>
    %13 = arith.addf %10, %12 : vector<128x256xf32>
    %cst_11 = arith.constant 0.000000e+00 : f32
    %14 = vector.broadcast %cst_11 : f32 to vector<128x256xf32>
    %15 = arith.maximumf %13, %14 : vector<128x256xf32>
    %16 = arith.truncf %15 : vector<128x256xf32> to vector<128x256xbf16>
    %c0_12 = arith.constant 0 : index
    %c0_13 = arith.constant 0 : index
    %17 = vector.load %arg6[%c0_12, %c0_13] : memref<256x128xbf16, #tpu.memory_space<vmem>>, vector<256x128xbf16>
    %cst_14 = arith.constant dense<0.000000e+00> : vector<128x128xf32>
    %18 = tpu.matmul %16, %17, %cst_14 {dimension_numbers = #tpu.dot_dimension_numbers<[1], [0], [0], [1], [0, 0, 1, 1], [], []>} : vector<128x256xbf16>, vector<256x128xbf16>, vector<128x128xf32> -> vector<128x128xf32>
    %c0_15 = arith.constant 0 : index
    %c0_16 = arith.constant 0 : index
    %19 = vector.load %arg7[%c0_15, %c0_16] : memref<1x128xf32, #tpu.memory_space<vmem>>, vector<1x128xf32>
    %20 = vector.broadcast %19 : vector<1x128xf32> to vector<128x128xf32>
    %21 = arith.addf %18, %20 : vector<128x128xf32>
    %22 = vector.extract_strided_slice %21 {offsets = [0, 0], sizes = [128, 4], strides = [1, 1]} : vector<128x128xf32> to vector<128x4xf32>
    %c0_17 = arith.constant 0 : index
    %c0_18 = arith.constant 0 : index
    %23 = vector.load %arg8[%c0_17, %c0_18] : memref<128x4xf32, #tpu.memory_space<vmem>>, vector<128x4xf32>
    tpu.vector_store %arg8[%c0_17, %c0_18], %22 {strides = array<i32>} : memref<128x4xf32, #tpu.memory_space<vmem>>, vector<128x4xf32>,
    return
  }
  func.func @transform_0(%arg0: i32) -> (i32, i32) {
    %c0_i32 = arith.constant 0 : i32
    %c0_i32_0 = arith.constant 0 : i32
    return %arg0, %c0_i32 : i32, i32
  }
  func.func @transform_1(%arg0: i32) -> (i32, i32) {
    %c0_i32 = arith.constant 0 : i32
    %c0_i32_0 = arith.constant 0 : i32
    %c0_i32_1 = arith.constant 0 : i32
    return %c0_i32, %c0_i32_0 : i32, i32
  }
  func.func @transform_2(%arg0: i32) -> (i32, i32) {
    %c0_i32 = arith.constant 0 : i32
    %c0_i32_0 = arith.constant 0 : i32
    %c0_i32_1 = arith.constant 0 : i32
    return %c0_i32, %c0_i32_0 : i32, i32
  }
  func.func @transform_3(%arg0: i32) -> (i32, i32) {
    %c0_i32 = arith.constant 0 : i32
    %c0_i32_0 = arith.constant 0 : i32
    %c0_i32_1 = arith.constant 0 : i32
    return %c0_i32, %c0_i32_0 : i32, i32
  }
  func.func @transform_4(%arg0: i32) -> (i32, i32) {
    %c0_i32 = arith.constant 0 : i32
    %c0_i32_0 = arith.constant 0 : i32
    %c0_i32_1 = arith.constant 0 : i32
    return %c0_i32, %c0_i32_0 : i32, i32
  }
  func.func @transform_5(%arg0: i32) -> (i32, i32) {
    %c0_i32 = arith.constant 0 : i32
    %c0_i32_0 = arith.constant 0 : i32
    %c0_i32_1 = arith.constant 0 : i32
    return %c0_i32, %c0_i32_0 : i32, i32
  }
  func.func @transform_6(%arg0: i32) -> (i32, i32) {
    %c0_i32 = arith.constant 0 : i32
    %c0_i32_0 = arith.constant 0 : i32
    %c0_i32_1 = arith.constant 0 : i32
    return %c0_i32, %c0_i32_0 : i32, i32
  }
  func.func @transform_7(%arg0: i32) -> (i32, i32) {
    %c0_i32 = arith.constant 0 : i32
    %c0_i32_0 = arith.constant 0 : i32
    return %arg0, %c0_i32 : i32, i32
  }
}

</mosaic_0001>

<llo_original>
// kernel: neural_network_forward.1
$region0: #{neural_network_forward.1}
  #allocation0 [shape = 'u32[]', space=smem, size = 0x4, offset = 0x4, fixed_abs, tag = 'smem constant byte address 0x4 - core index']
  #allocation1 [shape = 'u32[144,128]{1,0:T(1,128)}', space=vmem, size = 0x12000, scoped, tag = 'internal scratch']
  %s0 = inlined_call_operand.vmem [shape: bf16[200,16], index: 0, kind: input, shape index: {}]
  %s1 = inlined_call_operand.vmem [shape: bf16[16,256], index: 1, kind: input, shape index: {}]
  %s2 = inlined_call_operand.vmem [shape: f32[1,256], index: 2, kind: input, shape index: {}]
  %s3 = inlined_call_operand.hbm [shape: bf16[256,256], index: 3, kind: input, shape index: {}]
  %s4 = inlined_call_operand.vmem [shape: f32[1,256], index: 4, kind: input, shape index: {}]
  %s5 = inlined_call_operand.vmem [shape: bf16[256,128], index: 5, kind: input, shape index: {}]
  %s6 = inlined_call_operand.vmem [shape: f32[1,128], index: 6, kind: input, shape index: {}]
  %s7 = inlined_call_operand.vmem [shape: f32[200,4], index: 7, kind: output, shape index: {}]
  %s8 = sld [smem:[#allocation0]]
  $region113: #{neural_network_forward.1} parent=0
    _
  %s10 = ssub.s32 1, %s8
  %s11 = scalar_select 0, %s10, %s8
  $region1: #{neural_network_forward.1} parent=0
    #allocation2 [shape = 'u8[131072]{0}', space=vmem, size = 0x20000, scoped, tag = 'input window, operand 3, single buffered']
    #allocation3 [shape = 's32[2]{0}', space=sflag, size = 0x8, scoped, tag = 'scoped memory for neural_network_forward.1']
    #allocation4 [shape = 'u8[131072]{0}', space=vmem, size = 0x20000, scoped, tag = 'output window, operand 0']
    %12 = vsyncpa [#allocation3], 0
    loop: start=0, step=1, limit=4
    $region2: #{neural_network_forward.1} parent=1 // loop_pre_header
      _
    $region3: #{neural_network_forward.1} parent=1 // loop_header
      %s14 = sphi 0, %s18
      %p15 = scmp.ge.s32.totalorder %s14, 4
      %s24 = sphi 0, %s26
      %s27 = sphi 0, %s24
      %s28 = sphi 0, %s27
      %s44 = sphi 0, %s28
      %s48 = sphi 0, %s48
      %s50 = sphi 0, %s48
      %s51 = sphi 0, %s50
      %s65 = sphi 0, %s51
      %s69 = sphi 0, %s69
      %s71 = sphi 0, %s69
      %s72 = sphi 0, %s71
      %s86 = sphi 0, %s72
      %s90 = sphi 0, %s90
      %s92 = sphi 0, %s90
      %s93 = sphi 0, %s92
      %s107 = sphi 0, %s93
      %s111 = sphi 0, %s111
      %s113 = sphi 0, %s111
      %s114 = sphi 0, %s113
      %s128 = sphi 0, %s114
      %s132 = sphi 0, %s132
      %s134 = sphi 0, %s132
      %s135 = sphi 0, %s134
      %s149 = sphi 0, %s135
      %s153 = sphi 0, %s153
      %s155 = sphi 0, %s153
      %s156 = sphi 0, %s155
      %s170 = sphi 0, %s156
      %s176 = sphi 0, %s178
      %s179 = sphi 0, %s176
      %s180 = sphi 0, %s179
      %s196 = sphi 0, %s180
    $region4: #{neural_network_forward.1} parent=1 // loop_header_branch
      %17 = sbr.rel (%p15) target = $region8
    $region5: #{neural_network_forward.1} parent=1 // loop_body
      %s19 = ssub.s32 %s14, 1
      %s20 = ssub.s32 %s14, 2
      %s21 = sadd.s32 %s14, 1
      %s22 = ssub.s32 %s14, %s21
      %p23 = scmp.eq.s32.totalorder %s22, 0
      %s25 = sadd.s32 %s24, 1
      %s26 = scalar_select %p23, %s24, %s25
      %p29 = pneg %p23
      %p30 = scmp.eq.s32.totalorder %s14, 1
      %p31 = por %p29, %p30
      %p32 = scmp.ne.s32.totalorder %s24, %s27
      %p33 = scmp.eq.s32.totalorder %s14, 0
      %p34 = por %p32, %p33
      %p35 = scmp.ne.s32.totalorder %s24, %s27
      %p36 = scmp.eq.s32.totalorder %s19, 1
      %p37 = por %p35, %p36
      %p38 = scmp.ne.s32.totalorder %s27, %s28
      %p39 = scmp.eq.s32.totalorder %s19, 0
      %p40 = por %p38, %p39
      %p41 = scmp.ne.s32.totalorder %s27, %s28
      %p42 = scmp.eq.s32.totalorder %s20, 1
      %p43 = por %p41, %p42
      %p45 = scmp.ne.s32.totalorder %s28, %s44
      %p46 = scmp.eq.s32.totalorder %s20, 0
      %p47 = por %p45, %p46
      %s49 = sadd.s32 %s48, 1
      %p52 = scmp.eq.s32.totalorder %s14, 1
      %p53 = scmp.ne.s32.totalorder %s48, %s50
      %p54 = scmp.eq.s32.totalorder %s14, 0
      %p55 = por %p53, %p54
      %p56 = scmp.ne.s32.totalorder %s48, %s50
      %p57 = scmp.eq.s32.totalorder %s19, 1
      %p58 = por %p56, %p57
      %p59 = scmp.ne.s32.totalorder %s50, %s51
      %p60 = scmp.eq.s32.totalorder %s19, 0
      %p61 = por %p59, %p60
      %p62 = scmp.ne.s32.totalorder %s50, %s51
      %p63 = scmp.eq.s32.totalorder %s20, 1
      %p64 = por %p62, %p63
      %p66 = scmp.ne.s32.totalorder %s51, %s65
      %p67 = scmp.eq.s32.totalorder %s20, 0
      %p68 = por %p66, %p67
      %s70 = sadd.s32 %s69, 1
      %p73 = scmp.eq.s32.totalorder %s14, 1
      %p74 = scmp.ne.s32.totalorder %s69, %s71
      %p75 = scmp.eq.s32.totalorder %s14, 0
      %p76 = por %p74, %p75
      %p77 = scmp.ne.s32.totalorder %s69, %s71
      %p78 = scmp.eq.s32.totalorder %s19, 1
      %p79 = por %p77, %p78
      %p80 = scmp.ne.s32.totalorder %s71, %s72
      %p81 = scmp.eq.s32.totalorder %s19, 0
      %p82 = por %p80, %p81
      %p83 = scmp.ne.s32.totalorder %s71, %s72
      %p84 = scmp.eq.s32.totalorder %s20, 1
      %p85 = por %p83, %p84
      %p87 = scmp.ne.s32.totalorder %s72, %s86
      %p88 = scmp.eq.s32.totalorder %s20, 0
      %p89 = por %p87, %p88
      %s91 = sadd.s32 %s90, 1
      %p94 = scmp.eq.s32.totalorder %s14, 1
      %p95 = scmp.ne.s32.totalorder %s90, %s92
      %p96 = scmp.eq.s32.totalorder %s14, 0
      %p97 = por %p95, %p96
      %p98 = scmp.ne.s32.totalorder %s90, %s92
      %p99 = scmp.eq.s32.totalorder %s19, 1
      %p100 = por %p98, %p99
      %p101 = scmp.ne.s32.totalorder %s92, %s93
      %p102 = scmp.eq.s32.totalorder %s19, 0
      %p103 = por %p101, %p102
      %p104 = scmp.ne.s32.totalorder %s92, %s93
      %p105 = scmp.eq.s32.totalorder %s20, 1
      %p106 = por %p104, %p105
      %p108 = scmp.ne.s32.totalorder %s93, %s107
      %p109 = scmp.eq.s32.totalorder %s20, 0
      %p110 = por %p108, %p109
      %s112 = sadd.s32 %s111, 1
      %p115 = scmp.eq.s32.totalorder %s14, 1
      %p116 = scmp.ne.s32.totalorder %s111, %s113
      %p117 = scmp.eq.s32.totalorder %s14, 0
      %p118 = por %p116, %p117
      %p119 = scmp.ne.s32.totalorder %s111, %s113
      %p120 = scmp.eq.s32.totalorder %s19, 1
      %p121 = por %p119, %p120
      %p122 = scmp.ne.s32.totalorder %s113, %s114
      %p123 = scmp.eq.s32.totalorder %s19, 0
      %p124 = por %p122, %p123
      %p125 = scmp.ne.s32.totalorder %s113, %s114
      %p126 = scmp.eq.s32.totalorder %s20, 1
      %p127 = por %p125, %p126
      %p129 = scmp.ne.s32.totalorder %s114, %s128
      %p130 = scmp.eq.s32.totalorder %s20, 0
      %p131 = por %p129, %p130
      %s133 = sadd.s32 %s132, 1
      %p136 = scmp.eq.s32.totalorder %s14, 1
      %p137 = scmp.ne.s32.totalorder %s132, %s134
      %p138 = scmp.eq.s32.totalorder %s14, 0
      %p139 = por %p137, %p138
      %p140 = scmp.ne.s32.totalorder %s132, %s134
      %p141 = scmp.eq.s32.totalorder %s19, 1
      %p142 = por %p140, %p141
      %p143 = scmp.ne.s32.totalorder %s134, %s135
      %p144 = scmp.eq.s32.totalorder %s19, 0
      %p145 = por %p143, %p144
      %p146 = scmp.ne.s32.totalorder %s134, %s135
      %p147 = scmp.eq.s32.totalorder %s20, 1
      %p148 = por %p146, %p147
      %p150 = scmp.ne.s32.totalorder %s135, %s149
      %p151 = scmp.eq.s32.totalorder %s20, 0
      %p152 = por %p150, %p151
      %s154 = sadd.s32 %s153, 1
      %p157 = scmp.eq.s32.totalorder %s14, 1
      %p158 = scmp.ne.s32.totalorder %s153, %s155
      %p159 = scmp.eq.s32.totalorder %s14, 0
      %p160 = por %p158, %p159
      %p161 = scmp.ne.s32.totalorder %s153, %s155
      %p162 = scmp.eq.s32.totalorder %s19, 1
      %p163 = por %p161, %p162
      %p164 = scmp.ne.s32.totalorder %s155, %s156
      %p165 = scmp.eq.s32.totalorder %s19, 0
      %p166 = por %p164, %p165
      %p167 = scmp.ne.s32.totalorder %s155, %s156
      %p168 = scmp.eq.s32.totalorder %s20, 1
      %p169 = por %p167, %p168
      %p171 = scmp.ne.s32.totalorder %s156, %s170
      %p172 = scmp.eq.s32.totalorder %s20, 0
      %p173 = por %p171, %p172
      %s174 = ssub.s32 %s14, %s21
      %p175 = scmp.eq.s32.totalorder %s174, 0
      %s177 = sadd.s32 %s176, 1
      %s178 = scalar_select %p175, %s176, %s177
      %p181 = pneg %p175
      %p182 = scmp.eq.s32.totalorder %s14, 1
      %p183 = por %p181, %p182
      %p184 = scmp.ne.s32.totalorder %s176, %s179
      %p185 = scmp.eq.s32.totalorder %s14, 0
      %p186 = por %p184, %p185
      %p187 = scmp.ne.s32.totalorder %s176, %s179
      %p188 = scmp.eq.s32.totalorder %s19, 1
      %p189 = por %p187, %p188
      %p190 = scmp.ne.s32.totalorder %s179, %s180
      %p191 = scmp.eq.s32.totalorder %s19, 0
      %p192 = por %p190, %p191
      %p193 = scmp.ne.s32.totalorder %s179, %s180
      %p194 = scmp.eq.s32.totalorder %s20, 1
      %p195 = por %p193, %p194
      %p197 = scmp.ne.s32.totalorder %s180, %s196
      %p198 = scmp.eq.s32.totalorder %s20, 0
      %p199 = por %p197, %p198
      %p200 = scmp.le.s32.totalorder 1, %s14
      %p201 = scmp.lt.s32.totalorder %s14, 3
      %p202 = pnand %p200, %p201
      %p203 = pneg %p202
      // Predicated region
      $region9: #{neural_network_forward.1} parent=5 // pred_check
        _
      $region10: #{neural_network_forward.1} parent=5 // pred_check_branch
        %205 = sbr.rel (%p202) target = $region12
      $region11: #{neural_network_forward.1} parent=5 // pred_region
        %s206 = ssub.s32 %s14, 1
        // Predicated region
        $region13: #{neural_network_forward.1} parent=11 // pred_check
          %p207 = pneg %p61
        $region14: #{neural_network_forward.1} parent=11 // pred_check_branch
          %209 = sbr.rel (%p207) target = $region16
        $region15: #{neural_network_forward.1} parent=11 // pred_region
          _
        $region16: #{neural_network_forward.1} parent=11 // pred_fallthru
          _
        // Predicated region
        $region17: #{neural_network_forward.1} parent=11 // pred_check
          %p210 = pneg %p82
        $region18: #{neural_network_forward.1} parent=11 // pred_check_branch
          %212 = sbr.rel (%p210) target = $region20
        $region19: #{neural_network_forward.1} parent=11 // pred_region
          _
        $region20: #{neural_network_forward.1} parent=11 // pred_fallthru
          _
        // Predicated region
        $region21: #{neural_network_forward.1} parent=11 // pred_check
          %p213 = pneg %p103
        $region22: #{neural_network_forward.1} parent=11 // pred_check_branch
          %215 = sbr.rel (%p213) target = $region24
        $region23: #{neural_network_forward.1} parent=11 // pred_region
          %s217 = ssub.s32 4096, 4096
          %218 = vsyncadd [#allocation3], %s217
          %s219 = sshll.u32 [#allocation2], 4
          %s220 = int_to_ptr.vmem [resolvable:$true] %s219
          %225 = dma.hbm_to_vmem [thread:$0]  %s3, 4096, %s220, [#allocation3], 128, 128, 8
        $region24: #{neural_network_forward.1} parent=11 // pred_fallthru
          _
        // Predicated region
        $region25: #{neural_network_forward.1} parent=11 // pred_check
          %p226 = pneg %p124
        $region26: #{neural_network_forward.1} parent=11 // pred_check_branch
          %228 = sbr.rel (%p226) target = $region28
        $region27: #{neural_network_forward.1} parent=11 // pred_region
          _
        $region28: #{neural_network_forward.1} parent=11 // pred_fallthru
          _
        // Predicated region
        $region29: #{neural_network_forward.1} parent=11 // pred_check
          %p229 = pneg %p145
        $region30: #{neural_network_forward.1} parent=11 // pred_check_branch
          %231 = sbr.rel (%p229) target = $region32
        $region31: #{neural_network_forward.1} parent=11 // pred_region
          _
        $region32: #{neural_network_forward.1} parent=11 // pred_fallthru
          _
        // Predicated region
        $region33: #{neural_network_forward.1} parent=11 // pred_check
          %p232 = pneg %p166
        $region34: #{neural_network_forward.1} parent=11 // pred_check_branch
          %234 = sbr.rel (%p232) target = $region36
        $region35: #{neural_network_forward.1} parent=11 // pred_region
          _
        $region36: #{neural_network_forward.1} parent=11 // pred_fallthru
          _
      $region12: #{neural_network_forward.1} parent=5 // pred_fallthru
        _
      %p235 = scmp.lt.s32.totalorder %s14, 2
      // Predicated region
      $region37: #{neural_network_forward.1} parent=5 // pred_check
        %p236 = pneg %p235
      $region38: #{neural_network_forward.1} parent=5 // pred_check_branch
        %238 = sbr.rel (%p236) target = $region40
      $region39: #{neural_network_forward.1} parent=5 // pred_region
        // Predicated region
        $region41: #{neural_network_forward.1} parent=39 // pred_check
          %p239 = pneg %p34
        $region42: #{neural_network_forward.1} parent=39 // pred_check_branch
          %241 = sbr.rel (%p239) target = $region44
        $region43: #{neural_network_forward.1} parent=39 // pred_region
          %s242 = smul.u32 16, %s14
          %s243 = ssub.s32 25, %s242
          %p244 = scmp.lt.s32.totalorder %s243, 16
          %s245 = scalar_select %p244, %s243, 16
          %s246 = smul.u32 64, %s245
          %p247 = scmp.lt.s32.totalorder %s242, 24
          %s248 = scalar_select %p247, %s242, 24
          %s249 = smul.addr %s248, 4
          %s250 = scalar_lea.vmem %s0, %s249
          %s251 = smul.u32 16, %s14
          %s252 = ssub.s32 25, %s251
          %p253 = scmp.lt.s32.totalorder %s252, 16
          %s254 = scalar_select %p253, %s252, 16
          %s255 = smul.u32 64, %s254
        $region44: #{neural_network_forward.1} parent=39 // pred_fallthru
          _
      $region40: #{neural_network_forward.1} parent=5 // pred_fallthru
        _
      %p256 = scmp.le.s32.totalorder 1, %s14
      %p257 = scmp.lt.s32.totalorder %s14, 3
      %p258 = pnand %p256, %p257
      %p259 = pneg %p258
      // Predicated region
      $region45: #{neural_network_forward.1} parent=5 // pred_check
        _
      $region46: #{neural_network_forward.1} parent=5 // pred_check_branch
        %261 = sbr.rel (%p258) target = $region48
      $region47: #{neural_network_forward.1} parent=5 // pred_region
        %s262 = ssub.s32 %s14, 1
        // Predicated region
        $region49: #{neural_network_forward.1} parent=47 // pred_check
          %p263 = pneg %p103
        $region50: #{neural_network_forward.1} parent=47 // pred_check_branch
          %265 = sbr.rel (%p263) target = $region52
        $region51: #{neural_network_forward.1} parent=47 // pred_region
          %266 = dma.done [#allocation3], 4096
        $region52: #{neural_network_forward.1} parent=47 // pred_fallthru
          _
        %s267 = smul.u32 16, %s19
        %s268 = ssub.s32 25, %s267
        %p269 = scmp.lt.s32.totalorder %s268, 16
        %s270 = scalar_select %p269, %s268, 16
        %s271 = smul.u32 64, %s270
        %p272 = scmp.lt.s32.totalorder %s267, 24
        %s273 = scalar_select %p272, %s267, 24
        %s274 = smul.addr %s273, 4
        %s275 = scalar_lea.vmem %s0, %s274
        %p276 = pneg %p40
        %p277 = pneg %p37
        %p278 = pneg %p61
        %p279 = pneg %p58
        %p280 = pneg %p82
        %p281 = pneg %p79
        %p282 = pneg %p103
        %p283 = pneg %p100
        %p284 = pneg %p124
        %p285 = pneg %p121
        %p286 = pneg %p145
        %p287 = pneg %p142
        %p288 = pneg %p166
        %p289 = pneg %p163
        %p290 = pneg %p192
        %p291 = pneg %p189
        %s292 = sand.u32 %s179, 1
        %s293 = sand.u32 %s179, 1
        %s294 = smul.addr %s293, 128
        %s295 = scalar_lea.vmem [#allocation4], %s294
        %s296 = smul.u32 16, %s19
        %s297 = ssub.s32 25, %s296
        %p298 = scmp.lt.s32.totalorder %s297, 16
        %s299 = scalar_select %p298, %s297, 16
        %s300 = smul.u32 64, %s299
        %p301 = scmp.lt.s32.totalorder %s296, 24
        %s302 = scalar_select %p301, %s296, 24
        %s303 = smul.addr %s302, 4
        %s304 = scalar_lea.vmem %s0, %s303
        %s305 = smul.u32 16, %s19
        %s306 = ssub.s32 25, %s305
        %p307 = scmp.lt.s32.totalorder %s306, 16
        %s308 = scalar_select %p307, %s306, 16
        %s309 = smul.u32 64, %s308
        %s310 = smul.u32 16, %s19
        %s311 = ssub.s32 25, %s310
        %p312 = scmp.lt.s32.totalorder %s311, 16
        %s313 = scalar_select %p312, %s311, 16
        %s314 = smul.u32 128, %s313
        %v316 = vld [vmem:[%s304] sm:$0xf]
        %v317 = vld [vmem:[%s304 + $0x4] sm:$0xf]
        %v318 = vld [vmem:[%s304 + $0x8] sm:$0xf]
        %v319 = vld [vmem:[%s304 + $0xc] sm:$0xf]
        %v320 = vld [vmem:[%s304 + $0x10] sm:$0xf]
        %v321 = vld [vmem:[%s304 + $0x14] sm:$0xf]
        %v322 = vld [vmem:[%s304 + $0x18] sm:$0xf]
        %v323 = vld [vmem:[%s304 + $0x1c] sm:$0xf]
        %v324 = vld [vmem:[%s304 + $0x20] sm:$0xf]
        %v325 = vld [vmem:[%s304 + $0x24] sm:$0xf]
        %v326 = vld [vmem:[%s304 + $0x28] sm:$0xf]
        %v327 = vld [vmem:[%s304 + $0x2c] sm:$0xf]
        %v328 = vld [vmem:[%s304 + $0x30] sm:$0xf]
        %v329 = vld [vmem:[%s304 + $0x34] sm:$0xf]
        %v330 = vld [vmem:[%s304 + $0x38] sm:$0xf]
        %v331 = vld [vmem:[%s304 + $0x3c] sm:$0xf]
        %v332 = vld [vmem:[%s1] sm:$0xff]
        %v333 = vld [vmem:[%s1 + $0x8] sm:$0xff]
        %v334 = vld [vmem:[%s2] sm:$0x3]
        %v336 = vlaneseq
        %v337 = vshrl.u32 %v336, 7
        %v338 = vsub.s32 0, %v337
        %v339 = vrot.slane %v334, %v338
        %v340 = vlaneseq
        %v341 = vshrl.u32 %v340, 7
        %v342 = vsub.s32 1, %v341
        %v343 = vrot.slane %v334, %v342
        %v362 = vunpack.c.l.b16 %v316
        %v363 = vunpack.c.l.b16 %v317
        %v364 = vunpack.c.l.b16 %v318
        %v365 = vunpack.c.l.b16 %v319
        %v366 = vunpack.c.l.b16 %v320
        %v367 = vunpack.c.l.b16 %v321
        %v368 = vunpack.c.l.b16 %v322
        %v369 = vunpack.c.l.b16 %v323
        %v370 = vunpack.c.l.b16 %v324
        %v371 = vunpack.c.l.b16 %v325
        %v372 = vunpack.c.l.b16 %v326
        %v373 = vunpack.c.l.b16 %v327
        %v374 = vunpack.c.l.b16 %v328
        %v375 = vunpack.c.l.b16 %v329
        %v376 = vunpack.c.l.b16 %v330
        %v377 = vunpack.c.l.b16 %v331
        %v378 = vpack.c.b16 %v363, %v362
        %v379 = vpack.c.b16 %v365, %v364
        %v380 = vpack.c.b16 %v367, %v366
        %v381 = vpack.c.b16 %v369, %v368
        %v382 = vpack.c.b16 %v371, %v370
        %v383 = vpack.c.b16 %v373, %v372
        %v384 = vpack.c.b16 %v375, %v374
        %v385 = vpack.c.b16 %v377, %v376
        %v388 = vunpack.c.l.b16 %v332
        %v389 = vunpack.c.h.b16 %v332
        %v390 = vunpack.c.l.b16 %v333
        %v391 = vunpack.c.h.b16 %v333
        %v392 = vpack.c.b16 %v390, %v388
        %v393 = vpack.c.b16 %v391, %v389
        %vm396 = vcmask 130048
        %v398 = vsel %vm396, %v378, 0
        %v401 = vsel %vm396, %v379, 0
        %v404 = vsel %vm396, %v380, 0
        %v407 = vsel %vm396, %v381, 0
        %v410 = vsel %vm396, %v382, 0
        %v413 = vsel %vm396, %v383, 0
        %v416 = vsel %vm396, %v384, 0
        %v419 = vsel %vm396, %v385, 0
        %421 = vmatprep.subr.bf16.mxu0 %v393
        %422 = vmatpush1.bf16.msra.mxu0 %v392
        %423 = vmatprep.subr.bf16.mxu0 0
        %424 = vmatpush1.bf16.msra.mxu0 0
        %425 = vmatprep.subr.bf16.mxu0 0
        %426 = vmatpush1.bf16.msra.mxu0 0
        %427 = vmatprep.subr.bf16.mxu0 0
        %428 = vmatpush1.bf16.msra.mxu0 0
        %429 = vmatprep.subr.bf16.mxu0 0
        %430 = vmatpush1.bf16.msra.mxu0 0
        %431 = vmatprep.subr.bf16.mxu0 0
        %432 = vmatpush1.bf16.msra.mxu0 0
        %433 = vmatprep.subr.bf16.mxu0 0
        %434 = vmatpush1.bf16.msra.mxu0 0
        %435 = vmatprep.subr.bf16.mxu0 0
        %436 = vmatpush1.bf16.msra.mxu0 0
        %437 = vmatprep.subr.bf16.mxu0 0
        %438 = vmatpush1.bf16.msra.mxu0 0
        %439 = vmatprep.subr.bf16.mxu0 0
        %440 = vmatpush1.bf16.msra.mxu0 0
        %441 = vmatprep.subr.bf16.mxu0 0
        %442 = vmatpush1.bf16.msra.mxu0 0
        %443 = vmatprep.subr.bf16.mxu0 0
        %444 = vmatpush1.bf16.msra.mxu0 0
        %445 = vmatprep.subr.bf16.mxu0 0
        %446 = vmatpush1.bf16.msra.mxu0 0
        %447 = vmatprep.subr.bf16.mxu0 0
        %448 = vmatpush1.bf16.msra.mxu0 0
        %449 = vmatprep.subr.bf16.mxu0 0
        %450 = vmatpush1.bf16.msra.mxu0 0
        %451 = vmatprep.subr.bf16.mxu0 0
        %452 = vmatpush1.bf16.msra.mxu0 0
        %453 = vmatprep.mubr.bf16.mxu0 0
        %454 = vmatmul.mubr.bf16.gmra.mrb[0].mxu0 %v398
        %v455 = vpop.f32.mrb[0].mxu0
        %v456 = vadd.f32 %v339, %v455
        %v457 = vpop.f32.mrb[0].mxu0
        %v458 = vadd.f32 %v343, %v457
        %v459 = vpop.f32.mrb[0].mxu0
        %v460 = vadd.f32 %v339, %v459
        %v461 = vpop.f32.mrb[0].mxu0
        %v462 = vadd.f32 %v343, %v461
        %463 = vmatprep.mubr.bf16.mxu0 0
        %464 = vmatmul.mubr.bf16.gmra.mrb[0].mxu0 %v401
        %v465 = vpop.f32.mrb[0].mxu0
        %v466 = vadd.f32 %v339, %v465
        %v467 = vpop.f32.mrb[0].mxu0
        %v468 = vadd.f32 %v343, %v467
        %v469 = vpop.f32.mrb[0].mxu0
        %v470 = vadd.f32 %v339, %v469
        %v471 = vpop.f32.mrb[0].mxu0
        %v472 = vadd.f32 %v343, %v471
        %473 = vmatprep.mubr.bf16.mxu0 0
        %474 = vmatmul.mubr.bf16.gmra.mrb[0].mxu0 %v404
        %v475 = vpop.f32.mrb[0].mxu0
        %v476 = vadd.f32 %v339, %v475
        %v477 = vpop.f32.mrb[0].mxu0
        %v478 = vadd.f32 %v343, %v477
        %v479 = vpop.f32.mrb[0].mxu0
        %v480 = vadd.f32 %v339, %v479
        %v481 = vpop.f32.mrb[0].mxu0
        %v482 = vadd.f32 %v343, %v481
        %483 = vmatprep.mubr.bf16.mxu0 0
        %484 = vmatmul.mubr.bf16.gmra.mrb[0].mxu0 %v407
        %v485 = vpop.f32.mrb[0].mxu0
        %v486 = vadd.f32 %v339, %v485
        %v487 = vpop.f32.mrb[0].mxu0
        %v488 = vadd.f32 %v343, %v487
        %v489 = vpop.f32.mrb[0].mxu0
        %v490 = vadd.f32 %v339, %v489
        %v491 = vpop.f32.mrb[0].mxu0
        %v492 = vadd.f32 %v343, %v491
        %493 = vmatprep.mubr.bf16.mxu0 0
        %494 = vmatmul.mubr.bf16.gmra.mrb[0].mxu0 %v410
        %v495 = vpop.f32.mrb[0].mxu0
        %v496 = vadd.f32 %v339, %v495
        %v497 = vpop.f32.mrb[0].mxu0
        %v498 = vadd.f32 %v343, %v497
        %v499 = vpop.f32.mrb[0].mxu0
        %v500 = vadd.f32 %v339, %v499
        %v501 = vpop.f32.mrb[0].mxu0
        %v502 = vadd.f32 %v343, %v501
        %503 = vmatprep.mubr.bf16.mxu0 0
        %504 = vmatmul.mubr.bf16.gmra.mrb[0].mxu0 %v413
        %v505 = vpop.f32.mrb[0].mxu0
        %v506 = vadd.f32 %v339, %v505
        %v507 = vpop.f32.mrb[0].mxu0
        %v508 = vadd.f32 %v343, %v507
        %v509 = vpop.f32.mrb[0].mxu0
        %v510 = vadd.f32 %v339, %v509
        %v511 = vpop.f32.mrb[0].mxu0
        %v512 = vadd.f32 %v343, %v511
        %513 = vmatprep.mubr.bf16.mxu0 0
        %514 = vmatmul.mubr.bf16.gmra.mrb[0].mxu0 %v416
        %v515 = vpop.f32.mrb[0].mxu0
        %v516 = vadd.f32 %v339, %v515
        %v517 = vpop.f32.mrb[0].mxu0
        %v518 = vadd.f32 %v343, %v517
        %v519 = vpop.f32.mrb[0].mxu0
        %v520 = vadd.f32 %v339, %v519
        %v521 = vpop.f32.mrb[0].mxu0
        %v522 = vadd.f32 %v343, %v521
        %523 = vmatprep.mubr.bf16.mxu0 0
        %524 = vmatmul.mubr.bf16.gmra.mrb[0].mxu0 %v419
        %v525 = vpop.f32.mrb[0].mxu0
        %v526 = vadd.f32 %v339, %v525
        %v527 = vpop.f32.mrb[0].mxu0
        %v528 = vadd.f32 %v343, %v527
        %v529 = vpop.f32.mrb[0].mxu0
        %v530 = vadd.f32 %v339, %v529
        %v531 = vpop.f32.mrb[0].mxu0
        %v532 = vadd.f32 %v343, %v531
        %533 = vdwg.mxu0
        %v534 = vmax.f32 %v456, 0.0
        %v535 = vmax.f32 %v458, 0.0
        %v536 = vmax.f32 %v460, 0.0
        %v537 = vmax.f32 %v462, 0.0
        %v538 = vmax.f32 %v466, 0.0
        %v539 = vmax.f32 %v468, 0.0
        %v540 = vmax.f32 %v470, 0.0
        %v541 = vmax.f32 %v472, 0.0
        %v542 = vmax.f32 %v476, 0.0
        %v543 = vmax.f32 %v478, 0.0
        %v544 = vmax.f32 %v480, 0.0
        %v545 = vmax.f32 %v482, 0.0
        %v546 = vmax.f32 %v486, 0.0
        %v547 = vmax.f32 %v488, 0.0
        %v548 = vmax.f32 %v490, 0.0
        %v549 = vmax.f32 %v492, 0.0
        %v550 = vmax.f32 %v496, 0.0
        %v551 = vmax.f32 %v498, 0.0
        %v552 = vmax.f32 %v500, 0.0
        %v553 = vmax.f32 %v502, 0.0
        %v554 = vmax.f32 %v506, 0.0
        %v555 = vmax.f32 %v508, 0.0
        %v556 = vmax.f32 %v510, 0.0
        %v557 = vmax.f32 %v512, 0.0
        %v558 = vmax.f32 %v516, 0.0
        %v559 = vmax.f32 %v518, 0.0
        %v560 = vmax.f32 %v520, 0.0
        %v561 = vmax.f32 %v522, 0.0
        %v562 = vmax.f32 %v526, 0.0
        %v563 = vmax.f32 %v528, 0.0
        %v564 = vmax.f32 %v530, 0.0
        %v565 = vmax.f32 %v532, 0.0
        %v566 = vpack.c.bf16 %v536, %v534
        %v567 = vpack.c.bf16 %v537, %v535
        %v568 = vpack.c.bf16 %v540, %v538
        %v569 = vpack.c.bf16 %v541, %v539
        %v570 = vpack.c.bf16 %v544, %v542
        %v571 = vpack.c.bf16 %v545, %v543
        %v572 = vpack.c.bf16 %v548, %v546
        %v573 = vpack.c.bf16 %v549, %v547
        %v574 = vpack.c.bf16 %v552, %v550
        %v575 = vpack.c.bf16 %v553, %v551
        %v576 = vpack.c.bf16 %v556, %v554
        %v577 = vpack.c.bf16 %v557, %v555
        %v578 = vpack.c.bf16 %v560, %v558
        %v579 = vpack.c.bf16 %v561, %v559
        %v580 = vpack.c.bf16 %v564, %v562
        %v581 = vpack.c.bf16 %v565, %v563
        %v582 = vld [vmem:[#allocation2] sm:$0xff]
        %v583 = vld [vmem:[#allocation2 + $0x8] sm:$0xff]
        %v584 = vld [vmem:[#allocation2 + $0x10] sm:$0xff]
        %v585 = vld [vmem:[#allocation2 + $0x18] sm:$0xff]
        %v586 = vld [vmem:[#allocation2 + $0x20] sm:$0xff]
        %v587 = vld [vmem:[#allocation2 + $0x28] sm:$0xff]
        %v588 = vld [vmem:[#allocation2 + $0x30] sm:$0xff]
        %v589 = vld [vmem:[#allocation2 + $0x38] sm:$0xff]
        %v590 = vld [vmem:[#allocation2 + $0x40] sm:$0xff]
        %v591 = vld [vmem:[#allocation2 + $0x48] sm:$0xff]
        %v592 = vld [vmem:[#allocation2 + $0x50] sm:$0xff]
        %v593 = vld [vmem:[#allocation2 + $0x58] sm:$0xff]
        %v594 = vld [vmem:[#allocation2 + $0x60] sm:$0xff]
        %v595 = vld [vmem:[#allocation2 + $0x68] sm:$0xff]
        %v596 = vld [vmem:[#allocation2 + $0x70] sm:$0xff]
        %v597 = vld [vmem:[#allocation2 + $0x78] sm:$0xff]
        %v598 = vld [vmem:[#allocation2 + $0x80] sm:$0xff]
        %v599 = vld [vmem:[#allocation2 + $0x88] sm:$0xff]
        %v600 = vld [vmem:[#allocation2 + $0x90] sm:$0xff]
        %v601 = vld [vmem:[#allocation2 + $0x98] sm:$0xff]
        %v602 = vld [vmem:[#allocation2 + $0xa0] sm:$0xff]
        %v603 = vld [vmem:[#allocation2 + $0xa8] sm:$0xff]
        %v604 = vld [vmem:[#allocation2 + $0xb0] sm:$0xff]
        %v605 = vld [vmem:[#allocation2 + $0xb8] sm:$0xff]
        %v606 = vld [vmem:[#allocation2 + $0xc0] sm:$0xff]
        %v607 = vld [vmem:[#allocation2 + $0xc8] sm:$0xff]
        %v608 = vld [vmem:[#allocation2 + $0xd0] sm:$0xff]
        %v609 = vld [vmem:[#allocation2 + $0xd8] sm:$0xff]
        %v610 = vld [vmem:[#allocation2 + $0xe0] sm:$0xff]
        %v611 = vld [vmem:[#allocation2 + $0xe8] sm:$0xff]
        %v612 = vld [vmem:[#allocation2 + $0xf0] sm:$0xff]
        %v613 = vld [vmem:[#allocation2 + $0xf8] sm:$0xff]
        %v614 = vld [vmem:[%s4] sm:$0x3]
        %v616 = vlaneseq
        %v617 = vshrl.u32 %v616, 7
        %v618 = vsub.s32 0, %v617
        %v619 = vrot.slane %v614, %v618
        %v620 = vlaneseq
        %v621 = vshrl.u32 %v620, 7
        %v622 = vsub.s32 1, %v621
        %v623 = vrot.slane %v614, %v622
        %v658 = vunpack.c.l.b16 %v582
        %v659 = vunpack.c.h.b16 %v582
        %v660 = vunpack.c.l.b16 %v583
        %v661 = vunpack.c.h.b16 %v583
        %v662 = vunpack.c.l.b16 %v584
        %v663 = vunpack.c.h.b16 %v584
        %v664 = vunpack.c.l.b16 %v585
        %v665 = vunpack.c.h.b16 %v585
        %v666 = vunpack.c.l.b16 %v586
        %v667 = vunpack.c.h.b16 %v586
        %v668 = vunpack.c.l.b16 %v587
        %v669 = vunpack.c.h.b16 %v587
        %v670 = vunpack.c.l.b16 %v588
        %v671 = vunpack.c.h.b16 %v588
        %v672 = vunpack.c.l.b16 %v589
        %v673 = vunpack.c.h.b16 %v589
        %v674 = vunpack.c.l.b16 %v590
        %v675 = vunpack.c.h.b16 %v590
        %v676 = vunpack.c.l.b16 %v591
        %v677 = vunpack.c.h.b16 %v591
        %v678 = vunpack.c.l.b16 %v592
        %v679 = vunpack.c.h.b16 %v592
        %v680 = vunpack.c.l.b16 %v593
        %v681 = vunpack.c.h.b16 %v593
        %v682 = vunpack.c.l.b16 %v594
        %v683 = vunpack.c.h.b16 %v594
        %v684 = vunpack.c.l.b16 %v595
        %v685 = vunpack.c.h.b16 %v595
        %v686 = vunpack.c.l.b16 %v596
        %v687 = vunpack.c.h.b16 %v596
        %v688 = vunpack.c.l.b16 %v597
        %v689 = vunpack.c.h.b16 %v597
        %v690 = vunpack.c.l.b16 %v598
        %v691 = vunpack.c.h.b16 %v598
        %v692 = vunpack.c.l.b16 %v599
        %v693 = vunpack.c.h.b16 %v599
        %v694 = vunpack.c.l.b16 %v600
        %v695 = vunpack.c.h.b16 %v600
        %v696 = vunpack.c.l.b16 %v601
        %v697 = vunpack.c.h.b16 %v601
        %v698 = vunpack.c.l.b16 %v602
        %v699 = vunpack.c.h.b16 %v602
        %v700 = vunpack.c.l.b16 %v603
        %v701 = vunpack.c.h.b16 %v603
        %v702 = vunpack.c.l.b16 %v604
        %v703 = vunpack.c.h.b16 %v604
        %v704 = vunpack.c.l.b16 %v605
        %v705 = vunpack.c.h.b16 %v605
        %v706 = vunpack.c.l.b16 %v606
        %v707 = vunpack.c.h.b16 %v606
        %v708 = vunpack.c.l.b16 %v607
        %v709 = vunpack.c.h.b16 %v607
        %v710 = vunpack.c.l.b16 %v608
        %v711 = vunpack.c.h.b16 %v608
        %v712 = vunpack.c.l.b16 %v609
        %v713 = vunpack.c.h.b16 %v609
        %v714 = vunpack.c.l.b16 %v610
        %v715 = vunpack.c.h.b16 %v610
        %v716 = vunpack.c.l.b16 %v611
        %v717 = vunpack.c.h.b16 %v611
        %v718 = vunpack.c.l.b16 %v612
        %v719 = vunpack.c.h.b16 %v612
        %v720 = vunpack.c.l.b16 %v613
        %v721 = vunpack.c.h.b16 %v613
        %v722 = vpack.c.b16 %v660, %v658
        %v723 = vpack.c.b16 %v661, %v659
        %v724 = vpack.c.b16 %v664, %v662
        %v725 = vpack.c.b16 %v665, %v663
        %v726 = vpack.c.b16 %v668, %v666
        %v727 = vpack.c.b16 %v669, %v667
        %v728 = vpack.c.b16 %v672, %v670
        %v729 = vpack.c.b16 %v673, %v671
        %v730 = vpack.c.b16 %v676, %v674
        %v731 = vpack.c.b16 %v677, %v675
        %v732 = vpack.c.b16 %v680, %v678
        %v733 = vpack.c.b16 %v681, %v679
        %v734 = vpack.c.b16 %v684, %v682
        %v735 = vpack.c.b16 %v685, %v683
        %v736 = vpack.c.b16 %v688, %v686
        %v737 = vpack.c.b16 %v689, %v687
        %v738 = vpack.c.b16 %v692, %v690
        %v739 = vpack.c.b16 %v693, %v691
        %v740 = vpack.c.b16 %v696, %v694
        %v741 = vpack.c.b16 %v697, %v695
        %v742 = vpack.c.b16 %v700, %v698
        %v743 = vpack.c.b16 %v701, %v699
        %v744 = vpack.c.b16 %v704, %v702
        %v745 = vpack.c.b16 %v705, %v703
        %v746 = vpack.c.b16 %v708, %v706
        %v747 = vpack.c.b16 %v709, %v707
        %v748 = vpack.c.b16 %v712, %v710
        %v749 = vpack.c.b16 %v713, %v711
        %v750 = vpack.c.b16 %v716, %v714
        %v751 = vpack.c.b16 %v717, %v715
        %v752 = vpack.c.b16 %v720, %v718
        %v753 = vpack.c.b16 %v721, %v719
        %786 = vmatprep.subr.bf16.mxu0 %v723
        %787 = vmatpush1.bf16.msra.mxu0 %v722
        %788 = vmatprep.subr.bf16.mxu0 %v725
        %789 = vmatpush1.bf16.msra.mxu0 %v724
        %790 = vmatprep.subr.bf16.mxu0 %v727
        %791 = vmatpush1.bf16.msra.mxu0 %v726
        %792 = vmatprep.subr.bf16.mxu0 %v729
        %793 = vmatpush1.bf16.msra.mxu0 %v728
        %794 = vmatprep.subr.bf16.mxu0 %v731
        %795 = vmatpush1.bf16.msra.mxu0 %v730
        %796 = vmatprep.subr.bf16.mxu0 %v733
        %797 = vmatpush1.bf16.msra.mxu0 %v732
        %798 = vmatprep.subr.bf16.mxu0 %v735
        %799 = vmatpush1.bf16.msra.mxu0 %v734
        %800 = vmatprep.subr.bf16.mxu0 %v737
        %801 = vmatpush1.bf16.msra.mxu0 %v736
        %802 = vmatprep.subr.bf16.mxu0 %v739
        %803 = vmatpush1.bf16.msra.mxu0 %v738
        %804 = vmatprep.subr.bf16.mxu0 %v741
        %805 = vmatpush1.bf16.msra.mxu0 %v740
        %806 = vmatprep.subr.bf16.mxu0 %v743
        %807 = vmatpush1.bf16.msra.mxu0 %v742
        %808 = vmatprep.subr.bf16.mxu0 %v745
        %809 = vmatpush1.bf16.msra.mxu0 %v744
        %810 = vmatprep.subr.bf16.mxu0 %v747
        %811 = vmatpush1.bf16.msra.mxu0 %v746
        %812 = vmatprep.subr.bf16.mxu0 %v749
        %813 = vmatpush1.bf16.msra.mxu0 %v748
        %814 = vmatprep.subr.bf16.mxu0 %v751
        %815 = vmatpush1.bf16.msra.mxu0 %v750
        %816 = vmatprep.subr.bf16.mxu0 %v753
        %817 = vmatpush1.bf16.msra.mxu0 %v752
        %818 = vmatprep.mubr.bf16.mxu0 %v567
        %819 = vmatmul.mubr.bf16.gmra.mrb[0].mxu0 %v566
        %v820 = vpop.f32.mrb[0].mxu0
        %v821 = vadd.f32 %v619, %v820
        %v822 = vpop.f32.mrb[0].mxu0
        %v823 = vadd.f32 %v623, %v822
        %v824 = vpop.f32.mrb[0].mxu0
        %v825 = vadd.f32 %v619, %v824
        %v826 = vpop.f32.mrb[0].mxu0
        %v827 = vadd.f32 %v623, %v826
        %828 = vmatprep.mubr.bf16.mxu0 %v569
        %829 = vmatmul.mubr.bf16.gmra.mrb[0].mxu0 %v568
        %v830 = vpop.f32.mrb[0].mxu0
        %v831 = vadd.f32 %v619, %v830
        %v832 = vpop.f32.mrb[0].mxu0
        %v833 = vadd.f32 %v623, %v832
        %v834 = vpop.f32.mrb[0].mxu0
        %v835 = vadd.f32 %v619, %v834
        %v836 = vpop.f32.mrb[0].mxu0
        %v837 = vadd.f32 %v623, %v836
        %838 = vmatprep.mubr.bf16.mxu0 %v571
        %839 = vmatmul.mubr.bf16.gmra.mrb[0].mxu0 %v570
        %v840 = vpop.f32.mrb[0].mxu0
        %v841 = vadd.f32 %v619, %v840
        %v842 = vpop.f32.mrb[0].mxu0
        %v843 = vadd.f32 %v623, %v842
        %v844 = vpop.f32.mrb[0].mxu0
        %v845 = vadd.f32 %v619, %v844
        %v846 = vpop.f32.mrb[0].mxu0
        %v847 = vadd.f32 %v623, %v846
        %848 = vmatprep.mubr.bf16.mxu0 %v573
        %849 = vmatmul.mubr.bf16.gmra.mrb[0].mxu0 %v572
        %v850 = vpop.f32.mrb[0].mxu0
        %v851 = vadd.f32 %v619, %v850
        %v852 = vpop.f32.mrb[0].mxu0
        %v853 = vadd.f32 %v623, %v852
        %v854 = vpop.f32.mrb[0].mxu0
        %v855 = vadd.f32 %v619, %v854
        %v856 = vpop.f32.mrb[0].mxu0
        %v857 = vadd.f32 %v623, %v856
        %858 = vmatprep.mubr.bf16.mxu0 %v575
        %859 = vmatmul.mubr.bf16.gmra.mrb[0].mxu0 %v574
        %v860 = vpop.f32.mrb[0].mxu0
        %v861 = vadd.f32 %v619, %v860
        %v862 = vpop.f32.mrb[0].mxu0
        %v863 = vadd.f32 %v623, %v862
        %v864 = vpop.f32.mrb[0].mxu0
        %v865 = vadd.f32 %v619, %v864
        %v866 = vpop.f32.mrb[0].mxu0
        %v867 = vadd.f32 %v623, %v866
        %868 = vmatprep.mubr.bf16.mxu0 %v577
        %869 = vmatmul.mubr.bf16.gmra.mrb[0].mxu0 %v576
        %v870 = vpop.f32.mrb[0].mxu0
        %v871 = vadd.f32 %v619, %v870
        %v872 = vpop.f32.mrb[0].mxu0
        %v873 = vadd.f32 %v623, %v872
        %v874 = vpop.f32.mrb[0].mxu0
        %v875 = vadd.f32 %v619, %v874
        %v876 = vpop.f32.mrb[0].mxu0
        %v877 = vadd.f32 %v623, %v876
        %878 = vmatprep.mubr.bf16.mxu0 %v579
        %879 = vmatmul.mubr.bf16.gmra.mrb[0].mxu0 %v578
        %v880 = vpop.f32.mrb[0].mxu0
        %v881 = vadd.f32 %v619, %v880
        %v882 = vpop.f32.mrb[0].mxu0
        %v883 = vadd.f32 %v623, %v882
        %v884 = vpop.f32.mrb[0].mxu0
        %v885 = vadd.f32 %v619, %v884
        %v886 = vpop.f32.mrb[0].mxu0
        %v887 = vadd.f32 %v623, %v886
        %888 = vmatprep.mubr.bf16.mxu0 %v581
        %889 = vmatmul.mubr.bf16.gmra.mrb[0].mxu0 %v580
        %v890 = vpop.f32.mrb[0].mxu0
        %v891 = vadd.f32 %v619, %v890
        %v892 = vpop.f32.mrb[0].mxu0
        %v893 = vadd.f32 %v623, %v892
        %v894 = vpop.f32.mrb[0].mxu0
        %v895 = vadd.f32 %v619, %v894
        %v896 = vpop.f32.mrb[0].mxu0
        %v897 = vadd.f32 %v623, %v896
        %898 = vdwg.mxu0
        %v899 = vmax.f32 %v821, 0.0
        %v900 = vmax.f32 %v823, 0.0
        %v901 = vmax.f32 %v825, 0.0
        %v902 = vmax.f32 %v827, 0.0
        %v903 = vmax.f32 %v831, 0.0
        %v904 = vmax.f32 %v833, 0.0
        %v905 = vmax.f32 %v835, 0.0
        %v906 = vmax.f32 %v837, 0.0
        %v907 = vmax.f32 %v841, 0.0
        %v908 = vmax.f32 %v843, 0.0
        %v909 = vmax.f32 %v845, 0.0
        %v910 = vmax.f32 %v847, 0.0
        %v911 = vmax.f32 %v851, 0.0
        %v912 = vmax.f32 %v853, 0.0
        %v913 = vmax.f32 %v855, 0.0
        %v914 = vmax.f32 %v857, 0.0
        %v915 = vmax.f32 %v861, 0.0
        %v916 = vmax.f32 %v863, 0.0
        %v917 = vmax.f32 %v865, 0.0
        %v918 = vmax.f32 %v867, 0.0
        %v919 = vmax.f32 %v871, 0.0
        %v920 = vmax.f32 %v873, 0.0
        %v921 = vmax.f32 %v875, 0.0
        %v922 = vmax.f32 %v877, 0.0
        %v923 = vmax.f32 %v881, 0.0
        %v924 = vmax.f32 %v883, 0.0
        %v925 = vmax.f32 %v885, 0.0
        %v926 = vmax.f32 %v887, 0.0
        %v927 = vmax.f32 %v891, 0.0
        %v928 = vmax.f32 %v893, 0.0
        %v929 = vmax.f32 %v895, 0.0
        %v930 = vmax.f32 %v897, 0.0
        %v931 = vpack.c.bf16 %v901, %v899
        %v932 = vpack.c.bf16 %v902, %v900
        %v933 = vpack.c.bf16 %v905, %v903
        %v934 = vpack.c.bf16 %v906, %v904
        %v935 = vpack.c.bf16 %v909, %v907
        %v936 = vpack.c.bf16 %v910, %v908
        %v937 = vpack.c.bf16 %v913, %v911
        %v938 = vpack.c.bf16 %v914, %v912
        %v939 = vpack.c.bf16 %v917, %v915
        %v940 = vpack.c.bf16 %v918, %v916
        %v941 = vpack.c.bf16 %v921, %v919
        %v942 = vpack.c.bf16 %v922, %v920
        %v943 = vpack.c.bf16 %v925, %v923
        %v944 = vpack.c.bf16 %v926, %v924
        %v945 = vpack.c.bf16 %v929, %v927
        %v946 = vpack.c.bf16 %v930, %v928
        %v947 = vld [vmem:[%s5] sm:$0xf]
        %v948 = vld [vmem:[%s5 + $0x4] sm:$0xf]
        %v949 = vld [vmem:[%s5 + $0x8] sm:$0xf]
        %v950 = vld [vmem:[%s5 + $0xc] sm:$0xf]
        %v951 = vld [vmem:[%s5 + $0x10] sm:$0xf]
        %v952 = vld [vmem:[%s5 + $0x14] sm:$0xf]
        %v953 = vld [vmem:[%s5 + $0x18] sm:$0xf]
        %v954 = vld [vmem:[%s5 + $0x1c] sm:$0xf]
        %v955 = vld [vmem:[%s5 + $0x20] sm:$0xf]
        %v956 = vld [vmem:[%s5 + $0x24] sm:$0xf]
        %v957 = vld [vmem:[%s5 + $0x28] sm:$0xf]
        %v958 = vld [vmem:[%s5 + $0x2c] sm:$0xf]
        %v959 = vld [vmem:[%s5 + $0x30] sm:$0xf]
        %v960 = vld [vmem:[%s5 + $0x34] sm:$0xf]
        %v961 = vld [vmem:[%s5 + $0x38] sm:$0xf]
        %v962 = vld [vmem:[%s5 + $0x3c] sm:$0xf]
        %v963 = vld [vmem:[%s5 + $0x40] sm:$0xf]
        %v964 = vld [vmem:[%s5 + $0x44] sm:$0xf]
        %v965 = vld [vmem:[%s5 + $0x48] sm:$0xf]
        %v966 = vld [vmem:[%s5 + $0x4c] sm:$0xf]
        %v967 = vld [vmem:[%s5 + $0x50] sm:$0xf]
        %v968 = vld [vmem:[%s5 + $0x54] sm:$0xf]
        %v969 = vld [vmem:[%s5 + $0x58] sm:$0xf]
        %v970 = vld [vmem:[%s5 + $0x5c] sm:$0xf]
        %v971 = vld [vmem:[%s5 + $0x60] sm:$0xf]
        %v972 = vld [vmem:[%s5 + $0x64] sm:$0xf]
        %v973 = vld [vmem:[%s5 + $0x68] sm:$0xf]
        %v974 = vld [vmem:[%s5 + $0x6c] sm:$0xf]
        %v975 = vld [vmem:[%s5 + $0x70] sm:$0xf]
        %v976 = vld [vmem:[%s5 + $0x74] sm:$0xf]
        %v977 = vld [vmem:[%s5 + $0x78] sm:$0xf]
        %v978 = vld [vmem:[%s5 + $0x7c] sm:$0xf]
        %v979 = vld [vmem:[%s6] sm:$0x1]
        %v981 = vlaneseq
        %v982 = vshrl.u32 %v981, 7
        %v983 = vsub.s32 0, %v982
        %v984 = vrot.slane %v979, %v983
        %v1018 = vunpack.c.l.b16 %v947
        %v1019 = vunpack.c.l.b16 %v948
        %v1020 = vunpack.c.l.b16 %v949
        %v1021 = vunpack.c.l.b16 %v950
        %v1022 = vunpack.c.l.b16 %v951
        %v1023 = vunpack.c.l.b16 %v952
        %v1024 = vunpack.c.l.b16 %v953
        %v1025 = vunpack.c.l.b16 %v954
        %v1026 = vunpack.c.l.b16 %v955
        %v1027 = vunpack.c.l.b16 %v956
        %v1028 = vunpack.c.l.b16 %v957
        %v1029 = vunpack.c.l.b16 %v958
        %v1030 = vunpack.c.l.b16 %v959
        %v1031 = vunpack.c.l.b16 %v960
        %v1032 = vunpack.c.l.b16 %v961
        %v1033 = vunpack.c.l.b16 %v962
        %v1034 = vunpack.c.l.b16 %v963
        %v1035 = vunpack.c.l.b16 %v964
        %v1036 = vunpack.c.l.b16 %v965
        %v1037 = vunpack.c.l.b16 %v966
        %v1038 = vunpack.c.l.b16 %v967
        %v1039 = vunpack.c.l.b16 %v968
        %v1040 = vunpack.c.l.b16 %v969
        %v1041 = vunpack.c.l.b16 %v970
        %v1042 = vunpack.c.l.b16 %v971
        %v1043 = vunpack.c.l.b16 %v972
        %v1044 = vunpack.c.l.b16 %v973
        %v1045 = vunpack.c.l.b16 %v974
        %v1046 = vunpack.c.l.b16 %v975
        %v1047 = vunpack.c.l.b16 %v976
        %v1048 = vunpack.c.l.b16 %v977
        %v1049 = vunpack.c.l.b16 %v978
        %v1050 = vpack.c.b16 %v1019, %v1018
        %v1051 = vpack.c.b16 %v1021, %v1020
        %v1052 = vpack.c.b16 %v1023, %v1022
        %v1053 = vpack.c.b16 %v1025, %v1024
        %v1054 = vpack.c.b16 %v1027, %v1026
        %v1055 = vpack.c.b16 %v1029, %v1028
        %v1056 = vpack.c.b16 %v1031, %v1030
        %v1057 = vpack.c.b16 %v1033, %v1032
        %v1058 = vpack.c.b16 %v1035, %v1034
        %v1059 = vpack.c.b16 %v1037, %v1036
        %v1060 = vpack.c.b16 %v1039, %v1038
        %v1061 = vpack.c.b16 %v1041, %v1040
        %v1062 = vpack.c.b16 %v1043, %v1042
        %v1063 = vpack.c.b16 %v1045, %v1044
        %v1064 = vpack.c.b16 %v1047, %v1046
        %v1065 = vpack.c.b16 %v1049, %v1048
        %1082 = vmatprep.subr.bf16.mxu0 0
        %1083 = vmatpush1.bf16.msra.mxu0 %v1050
        %1084 = vmatprep.subr.bf16.mxu0 0
        %1085 = vmatpush1.bf16.msra.mxu0 %v1051
        %1086 = vmatprep.subr.bf16.mxu0 0
        %1087 = vmatpush1.bf16.msra.mxu0 %v1052
        %1088 = vmatprep.subr.bf16.mxu0 0
        %1089 = vmatpush1.bf16.msra.mxu0 %v1053
        %1090 = vmatprep.subr.bf16.mxu0 0
        %1091 = vmatpush1.bf16.msra.mxu0 %v1054
        %1092 = vmatprep.subr.bf16.mxu0 0
        %1093 = vmatpush1.bf16.msra.mxu0 %v1055
        %1094 = vmatprep.subr.bf16.mxu0 0
        %1095 = vmatpush1.bf16.msra.mxu0 %v1056
        %1096 = vmatprep.subr.bf16.mxu0 0
        %1097 = vmatpush1.bf16.msra.mxu0 %v1057
        %1098 = vmatprep.subr.bf16.mxu0 0
        %1099 = vmatpush1.bf16.msra.mxu0 %v1058
        %1100 = vmatprep.subr.bf16.mxu0 0
        %1101 = vmatpush1.bf16.msra.mxu0 %v1059
        %1102 = vmatprep.subr.bf16.mxu0 0
        %1103 = vmatpush1.bf16.msra.mxu0 %v1060
        %1104 = vmatprep.subr.bf16.mxu0 0
        %1105 = vmatpush1.bf16.msra.mxu0 %v1061
        %1106 = vmatprep.subr.bf16.mxu0 0
        %1107 = vmatpush1.bf16.msra.mxu0 %v1062
        %1108 = vmatprep.subr.bf16.mxu0 0
        %1109 = vmatpush1.bf16.msra.mxu0 %v1063
        %1110 = vmatprep.subr.bf16.mxu0 0
        %1111 = vmatpush1.bf16.msra.mxu0 %v1064
        %1112 = vmatprep.subr.bf16.mxu0 0
        %1113 = vmatpush1.bf16.msra.mxu0 %v1065
        %1114 = vmatprep.mubr.bf16.mxu0 %v932
        %1115 = vmatmul.mubr.bf16.gmra.mrb[0].mxu0 %v931
        %v1116 = vpop.f32.mrb[0].mxu0
        %v1117 = vadd.f32 %v984, %v1116
        %v1118 = vpop.f32.mrb[0].mxu0
        %v1119 = vpop.f32.mrb[0].mxu0
        %v1120 = vadd.f32 %v984, %v1119
        %v1121 = vpop.f32.mrb[0].mxu0
        %1122 = vmatprep.mubr.bf16.mxu0 %v934
        %1123 = vmatmul.mubr.bf16.gmra.mrb[0].mxu0 %v933
        %v1124 = vpop.f32.mrb[0].mxu0
        %v1125 = vadd.f32 %v984, %v1124
        %v1126 = vpop.f32.mrb[0].mxu0
        %v1127 = vpop.f32.mrb[0].mxu0
        %v1128 = vadd.f32 %v984, %v1127
        %v1129 = vpop.f32.mrb[0].mxu0
        %1130 = vmatprep.mubr.bf16.mxu0 %v936
        %1131 = vmatmul.mubr.bf16.gmra.mrb[0].mxu0 %v935
        %v1132 = vpop.f32.mrb[0].mxu0
        %v1133 = vadd.f32 %v984, %v1132
        %v1134 = vpop.f32.mrb[0].mxu0
        %v1135 = vpop.f32.mrb[0].mxu0
        %v1136 = vadd.f32 %v984, %v1135
        %v1137 = vpop.f32.mrb[0].mxu0
        %1138 = vmatprep.mubr.bf16.mxu0 %v938
        %1139 = vmatmul.mubr.bf16.gmra.mrb[0].mxu0 %v937
        %v1140 = vpop.f32.mrb[0].mxu0
        %v1141 = vadd.f32 %v984, %v1140
        %v1142 = vpop.f32.mrb[0].mxu0
        %v1143 = vpop.f32.mrb[0].mxu0
        %v1144 = vadd.f32 %v984, %v1143
        %v1145 = vpop.f32.mrb[0].mxu0
        %1146 = vmatprep.mubr.bf16.mxu0 %v940
        %1147 = vmatmul.mubr.bf16.gmra.mrb[0].mxu0 %v939
        %v1148 = vpop.f32.mrb[0].mxu0
        %v1149 = vadd.f32 %v984, %v1148
        %v1150 = vpop.f32.mrb[0].mxu0
        %v1151 = vpop.f32.mrb[0].mxu0
        %v1152 = vadd.f32 %v984, %v1151
        %v1153 = vpop.f32.mrb[0].mxu0
        %1154 = vmatprep.mubr.bf16.mxu0 %v942
        %1155 = vmatmul.mubr.bf16.gmra.mrb[0].mxu0 %v941
        %v1156 = vpop.f32.mrb[0].mxu0
        %v1157 = vadd.f32 %v984, %v1156
        %v1158 = vpop.f32.mrb[0].mxu0
        %v1159 = vpop.f32.mrb[0].mxu0
        %v1160 = vadd.f32 %v984, %v1159
        %v1161 = vpop.f32.mrb[0].mxu0
        %1162 = vmatprep.mubr.bf16.mxu0 %v944
        %1163 = vmatmul.mubr.bf16.gmra.mrb[0].mxu0 %v943
        %v1164 = vpop.f32.mrb[0].mxu0
        %v1165 = vadd.f32 %v984, %v1164
        %v1166 = vpop.f32.mrb[0].mxu0
        %v1167 = vpop.f32.mrb[0].mxu0
        %v1168 = vadd.f32 %v984, %v1167
        %v1169 = vpop.f32.mrb[0].mxu0
        %1170 = vmatprep.mubr.bf16.mxu0 %v946
        %1171 = vmatmul.mubr.bf16.gmra.mrb[0].mxu0 %v945
        %v1172 = vpop.f32.mrb[0].mxu0
        %v1173 = vadd.f32 %v984, %v1172
        %v1174 = vpop.f32.mrb[0].mxu0
        %v1175 = vpop.f32.mrb[0].mxu0
        %v1176 = vadd.f32 %v984, %v1175
        %v1177 = vpop.f32.mrb[0].mxu0
        %1178 = vdwg.mxu0
        %vm1179 = vcmask 31744
        %1180 = vst.msk [vmem:[%s295] sm:$0xff] %vm1179, %v1117
        %1181 = vst.msk [vmem:[%s295 + $0x8] sm:$0xff] %vm1179, %v1120
        %1182 = vst.msk [vmem:[%s295 + $0x10] sm:$0xff] %vm1179, %v1125
        %1183 = vst.msk [vmem:[%s295 + $0x18] sm:$0xff] %vm1179, %v1128
        %1184 = vst.msk [vmem:[%s295 + $0x20] sm:$0xff] %vm1179, %v1133
        %1185 = vst.msk [vmem:[%s295 + $0x28] sm:$0xff] %vm1179, %v1136
        %1186 = vst.msk [vmem:[%s295 + $0x30] sm:$0xff] %vm1179, %v1141
        %1187 = vst.msk [vmem:[%s295 + $0x38] sm:$0xff] %vm1179, %v1144
        %1188 = vst.msk [vmem:[%s295 + $0x40] sm:$0xff] %vm1179, %v1149
        %1189 = vst.msk [vmem:[%s295 + $0x48] sm:$0xff] %vm1179, %v1152
        %1190 = vst.msk [vmem:[%s295 + $0x50] sm:$0xff] %vm1179, %v1157
        %1191 = vst.msk [vmem:[%s295 + $0x58] sm:$0xff] %vm1179, %v1160
        %1192 = vst.msk [vmem:[%s295 + $0x60] sm:$0xff] %vm1179, %v1165
        %1193 = vst.msk [vmem:[%s295 + $0x68] sm:$0xff] %vm1179, %v1168
        %1194 = vst.msk [vmem:[%s295 + $0x70] sm:$0xff] %vm1179, %v1173
        %1195 = vst.msk [vmem:[%s295 + $0x78] sm:$0xff] %vm1179, %v1176
        %s1196 = sand.u32 %s179, 1
        %s1197 = sand.u32 %s179, 1
        %s1198 = smul.addr %s1197, 128
        %s1199 = scalar_lea.vmem [#allocation4], %s1198
        // Predicated region
        $region53: #{neural_network_forward.1} parent=47 // pred_check
          %p1200 = pneg %p189
        $region54: #{neural_network_forward.1} parent=47 // pred_check_branch
          %1202 = sbr.rel (%p1200) target = $region56
        $region55: #{neural_network_forward.1} parent=47 // pred_region
          %s1203 = smul.u32 16, %s19
          %s1204 = ssub.s32 25, %s1203
          %p1205 = scmp.lt.s32.totalorder %s1204, 16
          %s1206 = scalar_select %p1205, %s1204, 16
          %s1207 = smul.u32 128, %s1206
          %p1208 = scmp.ne.s32.totalorder 0, %s1207
          %s1209 = smul.addr %s1203, 8
          %s1210 = scalar_lea.vmem %s7, %s1209
          // Predicated region
          $region57: #{neural_network_forward.1} parent=55 // pred_check
            %p1211 = pneg %p1208
          $region58: #{neural_network_forward.1} parent=55 // pred_check_branch
            %1213 = sbr.rel (%p1211) target = $region60
          $region59: #{neural_network_forward.1} parent=55 // pred_region
            // Predicated region
            $region61: #{neural_network_forward.1} parent=59 // pred_check
              _
            $region62: #{neural_network_forward.1} parent=59 // pred_check_branch
              %1215 = sbr.rel (0) target = $region64
            $region63: #{neural_network_forward.1} parent=59 // pred_region
              // Predicated region
              $region83: #{neural_network_forward.1} parent=63 // pred_check
                _
              $region84: #{neural_network_forward.1} parent=63 // pred_check_branch
                %1294 = sbr.rel (0) target = $region86
              $region85: #{neural_network_forward.1} parent=63 // pred_region
                %s1295 = sshrl.u32 %s1206, 4
                // While loop
                $region87: #{neural_network_forward.1} parent=85 // loop_pre_header
                  _
                $region88: #{neural_network_forward.1} parent=85 // loop_header
                  %s1297 = sphi 0, %s1299
                  %p1298 = scmp.ge.s32.totalorder %s1297, %s1295
                  %s1302 = sphi 0, %s1339
                  %s1303 = sphi %s1199, %s1342
                  %s1304 = sphi %s1210, %s1343
                $region89: #{neural_network_forward.1} parent=85 // loop_header_branch
                  %1301 = sbr.rel (%p1298) target = $region93
                $region90: #{neural_network_forward.1} parent=85 // loop_body
                  %v1305 = vld [vmem:[%s1303] sm:$0xff]
                  %1306 = vst [vmem:[%s1304] sm:$0xff] %v1305
                  %v1307 = vld [vmem:[%s1303 + $0x8] sm:$0xff]
                  %1308 = vst [vmem:[%s1304 + $0x8] sm:$0xff] %v1307
                  %v1309 = vld [vmem:[%s1303 + $0x10] sm:$0xff]
                  %1310 = vst [vmem:[%s1304 + $0x10] sm:$0xff] %v1309
                  %v1311 = vld [vmem:[%s1303 + $0x18] sm:$0xff]
                  %1312 = vst [vmem:[%s1304 + $0x18] sm:$0xff] %v1311
                  %v1313 = vld [vmem:[%s1303 + $0x20] sm:$0xff]
                  %1314 = vst [vmem:[%s1304 + $0x20] sm:$0xff] %v1313
                  %v1315 = vld [vmem:[%s1303 + $0x28] sm:$0xff]
                  %1316 = vst [vmem:[%s1304 + $0x28] sm:$0xff] %v1315
                  %v1317 = vld [vmem:[%s1303 + $0x30] sm:$0xff]
                  %1318 = vst [vmem:[%s1304 + $0x30] sm:$0xff] %v1317
                  %v1319 = vld [vmem:[%s1303 + $0x38] sm:$0xff]
                  %1320 = vst [vmem:[%s1304 + $0x38] sm:$0xff] %v1319
                  %v1321 = vld [vmem:[%s1303 + $0x40] sm:$0xff]
                  %1322 = vst [vmem:[%s1304 + $0x40] sm:$0xff] %v1321
                  %v1323 = vld [vmem:[%s1303 + $0x48] sm:$0xff]
                  %1324 = vst [vmem:[%s1304 + $0x48] sm:$0xff] %v1323
                  %v1325 = vld [vmem:[%s1303 + $0x50] sm:$0xff]
                  %1326 = vst [vmem:[%s1304 + $0x50] sm:$0xff] %v1325
                  %v1327 = vld [vmem:[%s1303 + $0x58] sm:$0xff]
                  %1328 = vst [vmem:[%s1304 + $0x58] sm:$0xff] %v1327
                  %v1329 = vld [vmem:[%s1303 + $0x60] sm:$0xff]
                  %1330 = vst [vmem:[%s1304 + $0x60] sm:$0xff] %v1329
                  %v1331 = vld [vmem:[%s1303 + $0x68] sm:$0xff]
                  %1332 = vst [vmem:[%s1304 + $0x68] sm:$0xff] %v1331
                  %v1333 = vld [vmem:[%s1303 + $0x70] sm:$0xff]
                  %1334 = vst [vmem:[%s1304 + $0x70] sm:$0xff] %v1333
                  %v1335 = vld [vmem:[%s1303 + $0x78] sm:$0xff]
                  %1336 = vst [vmem:[%s1304 + $0x78] sm:$0xff] %v1335
                  %s1337 = sadd.s32 1, %s1302
                  %p1338 = scmp.ge.s32.totalorder %s1337, %s1295
                  %s1339 = scalar_select %p1338, 0, %s1337
                  %s1340 = smul.u32 %s1339, 128
                  %s1341 = smul.u32 %s1339, 128
                  %s1342 = scalar_lea.vmem %s1199, %s1340 [#allocation4]
                  %s1343 = scalar_lea.vmem %s1210, %s1341
                $region91: #{neural_network_forward.1} parent=85 // loop_footer
                  %s1299 = sadd.s32 %s1297, 1
                $region92: #{neural_network_forward.1} parent=85 // loop_footer_branch
                  %1296 = sbr.rel target = $region88
                $region93: #{neural_network_forward.1} parent=85 // loop_exit
                  _
                %s1344 = sshrl.u32 %s1206, 4
                %s1345 = sand.u32 %s1206, 15
                %s1346 = smul.u32 %s1344, 16
                %s1347 = smul.u32 8, %s1346
                %s1348 = scalar_lea.vmem %s1199, %s1347 [#allocation4]
                %s1349 = smul.u32 8, %s1346
                %s1350 = scalar_lea.vmem %s1210, %s1349
                // While loop
                $region94: #{neural_network_forward.1} parent=85 // loop_pre_header
                  _
                $region95: #{neural_network_forward.1} parent=85 // loop_header
                  %s1352 = sphi 0, %s1354
                  %p1353 = scmp.ge.s32.totalorder %s1352, %s1345
                  %s1357 = sphi 0, %s1364
                  %s1358 = sphi %s1348, %s1367
                  %s1359 = sphi %s1350, %s1368
                $region96: #{neural_network_forward.1} parent=85 // loop_header_branch
                  %1356 = sbr.rel (%p1353) target = $region100
                $region97: #{neural_network_forward.1} parent=85 // loop_body
                  %v1360 = vld [vmem:[%s1358] sm:$0xff]
                  %1361 = vst [vmem:[%s1359] sm:$0xff] %v1360
                  %s1362 = sadd.s32 1, %s1357
                  %p1363 = scmp.ge.s32.totalorder %s1362, %s1345
                  %s1364 = scalar_select %p1363, 0, %s1362
                  %s1365 = smul.u32 %s1364, 8
                  %s1366 = smul.u32 %s1364, 8
                  %s1367 = scalar_lea.vmem %s1348, %s1365 [#allocation4]
                  %s1368 = scalar_lea.vmem %s1350, %s1366
                $region98: #{neural_network_forward.1} parent=85 // loop_footer
                  %s1354 = sadd.s32 %s1352, 1
                $region99: #{neural_network_forward.1} parent=85 // loop_footer_branch
                  %1351 = sbr.rel target = $region95
                $region100: #{neural_network_forward.1} parent=85 // loop_exit
                  _
              $region86: #{neural_network_forward.1} parent=63 // pred_fallthru
                _
              // Predicated region
              $region101: #{neural_network_forward.1} parent=63 // pred_check
                _
              $region102: #{neural_network_forward.1} parent=63 // pred_check_branch
                %1370 = sbr.rel target = $region104
              $region103: #{neural_network_forward.1} parent=63 // pred_region
                _
              $region104: #{neural_network_forward.1} parent=63 // pred_fallthru
                _
            $region64: #{neural_network_forward.1} parent=59 // pred_fallthru
              _
            // Predicated region
            $region65: #{neural_network_forward.1} parent=59 // pred_check
              _
            $region66: #{neural_network_forward.1} parent=59 // pred_check_branch
              %1217 = sbr.rel target = $region68
            $region67: #{neural_network_forward.1} parent=59 // pred_region
              %s1219 = sshrl.u32 %s1206, 4
              // While loop
              $region69: #{neural_network_forward.1} parent=67 // loop_pre_header
                _
              $region70: #{neural_network_forward.1} parent=67 // loop_header
                %s1221 = sphi 0, %s1223
                %p1222 = scmp.ge.s32.totalorder %s1221, %s1219
                %s1226 = sphi 0, %s1263
                %s1227 = sphi %s1199, %s1266
                %s1228 = sphi %s1210, %s1267
              $region71: #{neural_network_forward.1} parent=67 // loop_header_branch
                %1225 = sbr.rel (%p1222) target = $region75
              $region72: #{neural_network_forward.1} parent=67 // loop_body
                %v1229 = vld [vmem:[%s1227] sm:$0xff]
                %1230 = vst [vmem:[%s1228] sm:$0xff] %v1229
                %v1231 = vld [vmem:[%s1227 + $0x8] sm:$0xff]
                %1232 = vst [vmem:[%s1228 + $0x8] sm:$0xff] %v1231
                %v1233 = vld [vmem:[%s1227 + $0x10] sm:$0xff]
                %1234 = vst [vmem:[%s1228 + $0x10] sm:$0xff] %v1233
                %v1235 = vld [vmem:[%s1227 + $0x18] sm:$0xff]
                %1236 = vst [vmem:[%s1228 + $0x18] sm:$0xff] %v1235
                %v1237 = vld [vmem:[%s1227 + $0x20] sm:$0xff]
                %1238 = vst [vmem:[%s1228 + $0x20] sm:$0xff] %v1237
                %v1239 = vld [vmem:[%s1227 + $0x28] sm:$0xff]
                %1240 = vst [vmem:[%s1228 + $0x28] sm:$0xff] %v1239
                %v1241 = vld [vmem:[%s1227 + $0x30] sm:$0xff]
                %1242 = vst [vmem:[%s1228 + $0x30] sm:$0xff] %v1241
                %v1243 = vld [vmem:[%s1227 + $0x38] sm:$0xff]
                %1244 = vst [vmem:[%s1228 + $0x38] sm:$0xff] %v1243
                %v1245 = vld [vmem:[%s1227 + $0x40] sm:$0xff]
                %1246 = vst [vmem:[%s1228 + $0x40] sm:$0xff] %v1245
                %v1247 = vld [vmem:[%s1227 + $0x48] sm:$0xff]
                %1248 = vst [vmem:[%s1228 + $0x48] sm:$0xff] %v1247
                %v1249 = vld [vmem:[%s1227 + $0x50] sm:$0xff]
                %1250 = vst [vmem:[%s1228 + $0x50] sm:$0xff] %v1249
                %v1251 = vld [vmem:[%s1227 + $0x58] sm:$0xff]
                %1252 = vst [vmem:[%s1228 + $0x58] sm:$0xff] %v1251
                %v1253 = vld [vmem:[%s1227 + $0x60] sm:$0xff]
                %1254 = vst [vmem:[%s1228 + $0x60] sm:$0xff] %v1253
                %v1255 = vld [vmem:[%s1227 + $0x68] sm:$0xff]
                %1256 = vst [vmem:[%s1228 + $0x68] sm:$0xff] %v1255
                %v1257 = vld [vmem:[%s1227 + $0x70] sm:$0xff]
                %1258 = vst [vmem:[%s1228 + $0x70] sm:$0xff] %v1257
                %v1259 = vld [vmem:[%s1227 + $0x78] sm:$0xff]
                %1260 = vst [vmem:[%s1228 + $0x78] sm:$0xff] %v1259
                %s1261 = sadd.s32 1, %s1226
                %p1262 = scmp.ge.s32.totalorder %s1261, %s1219
                %s1263 = scalar_select %p1262, 0, %s1261
                %s1264 = smul.u32 %s1263, 128
                %s1265 = smul.u32 %s1263, 128
                %s1266 = scalar_lea.vmem %s1199, %s1264 [#allocation4]
                %s1267 = scalar_lea.vmem %s1210, %s1265
              $region73: #{neural_network_forward.1} parent=67 // loop_footer
                %s1223 = sadd.s32 %s1221, 1
              $region74: #{neural_network_forward.1} parent=67 // loop_footer_branch
                %1220 = sbr.rel target = $region70
              $region75: #{neural_network_forward.1} parent=67 // loop_exit
                _
              %s1268 = sshrl.u32 %s1206, 4
              %s1269 = sand.u32 %s1206, 15
              %s1270 = smul.u32 %s1268, 16
              %s1271 = smul.u32 8, %s1270
              %s1272 = scalar_lea.vmem %s1199, %s1271 [#allocation4]
              %s1273 = smul.u32 8, %s1270
              %s1274 = scalar_lea.vmem %s1210, %s1273
              // While loop
              $region76: #{neural_network_forward.1} parent=67 // loop_pre_header
                _
              $region77: #{neural_network_forward.1} parent=67 // loop_header
                %s1276 = sphi 0, %s1278
                %p1277 = scmp.ge.s32.totalorder %s1276, %s1269
                %s1281 = sphi 0, %s1288
                %s1282 = sphi %s1272, %s1291
                %s1283 = sphi %s1274, %s1292
              $region78: #{neural_network_forward.1} parent=67 // loop_header_branch
                %1280 = sbr.rel (%p1277) target = $region82
              $region79: #{neural_network_forward.1} parent=67 // loop_body
                %v1284 = vld [vmem:[%s1282] sm:$0xff]
                %1285 = vst [vmem:[%s1283] sm:$0xff] %v1284
                %s1286 = sadd.s32 1, %s1281
                %p1287 = scmp.ge.s32.totalorder %s1286, %s1269
                %s1288 = scalar_select %p1287, 0, %s1286
                %s1289 = smul.u32 %s1288, 8
                %s1290 = smul.u32 %s1288, 8
                %s1291 = scalar_lea.vmem %s1272, %s1289 [#allocation4]
                %s1292 = scalar_lea.vmem %s1274, %s1290
              $region80: #{neural_network_forward.1} parent=67 // loop_footer
                %s1278 = sadd.s32 %s1276, 1
              $region81: #{neural_network_forward.1} parent=67 // loop_footer_branch
                %1275 = sbr.rel target = $region77
              $region82: #{neural_network_forward.1} parent=67 // loop_exit
                _
            $region68: #{neural_network_forward.1} parent=59 // pred_fallthru
              _
          $region60: #{neural_network_forward.1} parent=55 // pred_fallthru
            _
          %1371 = vnop
        $region56: #{neural_network_forward.1} parent=47 // pred_fallthru
          _
      $region48: #{neural_network_forward.1} parent=5 // pred_fallthru
        _
      %p1372 = scmp.le.s32.totalorder 2, %s14
      // Predicated region
      $region105: #{neural_network_forward.1} parent=5 // pred_check
        %p1373 = pneg %p1372
      $region106: #{neural_network_forward.1} parent=5 // pred_check_branch
        %1375 = sbr.rel (%p1373) target = $region108
      $region107: #{neural_network_forward.1} parent=5 // pred_region
        %s1376 = ssub.s32 %s14, 2
        // Predicated region
        $region109: #{neural_network_forward.1} parent=107 // pred_check
          %p1377 = pneg %p195
        $region110: #{neural_network_forward.1} parent=107 // pred_check_branch
          %1379 = sbr.rel (%p1377) target = $region112
        $region111: #{neural_network_forward.1} parent=107 // pred_region
          %s1380 = sand.u32 %s180, 1
          %s1381 = sand.u32 %s180, 1
          %s1382 = smul.addr %s1381, 128
          %s1383 = scalar_lea.vmem [#allocation4], %s1382
        $region112: #{neural_network_forward.1} parent=107 // pred_fallthru
          _
      $region108: #{neural_network_forward.1} parent=5 // pred_fallthru
        _
    $region6: #{neural_network_forward.1} parent=1 // loop_footer
      %s18 = sadd.s32 1, %s14
    $region7: #{neural_network_forward.1} parent=1 // loop_footer_branch
      %13 = sbr.rel target = $region3
    $region8: #{neural_network_forward.1} parent=1 // loop_exit
      _
    %1384 = vsyncpa [#allocation3], 1
    %s1385 = scalar_lea.sflag [#allocation3], 1
    %1386 = vsyncpa %s1385, 1

</llo_original>
